<compile_context>
chip_gen: v7x
topology: tpu7x:2x2x1
jax: 0.10.0
libtpu: 0.0.40
codegen_flags: <defaults>
</compile_context>

<pallas_src>
import jax
import jax.numpy as jnp
from jax.experimental import pallas as pl
from jax.experimental.pallas import tpu as pltpu


def _round_up(n, m):
    return ((n + m - 1) // m) * m


def head_kernel(x_ref, w1_ref, b1_ref, w2_ref, b2_ref, w3_ref, b3_ref, o_ref):
    # Layer 1 (768 -> 256): bf16 MXU matmul, f32 accumulation; bias/ReLU in f32.
    h1 = jnp.dot(x_ref[...], w1_ref[...], preferred_element_type=jnp.float32)
    h1 = jnp.maximum(h1 + b1_ref[...], 0.0)
    # dropout1: identity (eval mode)

    # Layer 2 (256 -> 64): cast activations back to bf16 for MXU rate.
    h2 = jnp.dot(h1.astype(jnp.bfloat16), w2_ref[...],
                 preferred_element_type=jnp.float32)
    h2 = jnp.maximum(h2 + b2_ref[...], 0.0)
    # dropout2: identity (eval mode)

    # Layer 3 (64 -> 1): N=1 would waste the MXU (and pay a full systolic
    # push/drain for one column), so use a VPU multiply + XLU lane reduction.
    # b3 comes from SMEM as a scalar (no (8,128)-padded VMEM tile / vreg bcast).
    h3 = jnp.sum(h2 * w3_ref[...], axis=-1, keepdims=True) + b3_ref[0, 0]
    h3 = jnp.maximum(h3, 0.0)

    # Sigmoid: exp + approximate reciprocal, both on the (otherwise idle) EUP.
    o_ref[...] = pl.reciprocal(1.0 + jnp.exp(-h3), approx=True).astype(o_ref.dtype)


def classification_head(x, w1, b1, w2, b2, w3, b3, *, tile_b=256):
    """MLP head on the pooled BERT output.

    x:  [B, 768] float32 (pooled BERT output)
    w1: [768, 256], b1: [1, 256]
    w2: [256, 64],  b2: [1, 64]
    w3: [64, 1],    b3: [1, 1]
    returns [B, 1] float32 in [0.5, 1)  (ReLU before sigmoid, as in the module)
    """
    B = x.shape[0]
    # Batch tile: multiple of 8 (sublanes); clamp for tiny batches.
    tb = min(tile_b, max(8, _round_up(B, 8)))
    Bp = _round_up(B, tb)

    # bf16 at the call boundary: halves HBM bytes for x / big weights.
    x_bf = x.astype(jnp.bfloat16)
    if Bp != B:
        x_bf = jnp.pad(x_bf, ((0, Bp - B), (0, 0)))
    w1_bf = w1.astype(jnp.bfloat16)
    w2_bf = w2.astype(jnp.bfloat16)
    w3_row = w3.reshape(1, 64).astype(jnp.float32)  # broadcast over lanes in-kernel
    b3_s = b3.reshape(1, 1).astype(jnp.float32)     # SMEM scalar

    out = pl.pallas_call(
        head_kernel,
        out_shape=jax.ShapeDtypeStruct((Bp, 1), jnp.float32),
        grid=(Bp // tb,),
        in_specs=[
            pl.BlockSpec((tb, 768), lambda i: (i, 0)),            # x: streamed per tile
            pl.BlockSpec((768, 256), lambda i: (0, 0)),           # w1: VMEM-resident
            pl.BlockSpec((1, 256), lambda i: (0, 0)),             # b1
            pl.BlockSpec((256, 64), lambda i: (0, 0)),            # w2: VMEM-resident
            pl.BlockSpec((1, 64), lambda i: (0, 0)),              # b2
            pl.BlockSpec((1, 64), lambda i: (0, 0)),              # w3 row (VPU path)
            pl.BlockSpec(memory_space=pltpu.MemorySpace.SMEM),    # b3 scalar
        ],
        # Note: last-dim-1 output stores are masked, but output traffic
        # (4 B/row) is negligible next to the x stream, so we keep the natural
        # (B, 1) layout rather than transposing batch onto lanes.
        out_specs=pl.BlockSpec((tb, 1), lambda i: (i, 0)),
        compiler_params=pltpu.CompilerParams(
            dimension_semantics=("parallel",)),
    )(x_bf, w1_bf, b1, w2_bf, b2, w3_row, b3_s)
    return out[:B]


def init_params(key):
    # Deterministic synthetic parameters matching nn.Linear shapes
    # (stored transposed: (in, out)).  Biases kept 2-D (1, out) for TPU layout.
    k1, k2, k3, k4, k5, k6 = jax.random.split(key, 6)

    def lin(kw, kb, fan_in, fan_out):
        bound = 1.0 / jnp.sqrt(fan_in)
        w = jax.random.uniform(kw, (fan_in, fan_out), jnp.float32, -bound, bound)
        b = jax.random.uniform(kb, (1, fan_out), jnp.float32, -bound, bound)
        return w, b

    w1, b1 = lin(k1, k2, 768, 256)
    w2, b2 = lin(k3, k4, 256, 64)
    w3, b3 = lin(k5, k6, 64, 1)
    return w1, b1, w2, b2, w3, b3


def reference(x, w1, b1, w2, b2, w3, b3):
    # Mirrors the kernel's numerics: bf16 matmul inputs, f32 accumulation.
    h1 = jnp.dot(x.astype(jnp.bfloat16), w1.astype(jnp.bfloat16),
                 preferred_element_type=jnp.float32) + b1
    h1 = jnp.maximum(h1, 0.0)
    h2 = jnp.dot(h1.astype(jnp.bfloat16), w2.astype(jnp.bfloat16),
                 preferred_element_type=jnp.float32) + b2
    h2 = jnp.maximum(h2, 0.0)
    h3 = jnp.maximum(h2 @ w3 + b3, 0.0)
    return jax.nn.sigmoid(h3)


if __name__ == "__main__":
    key = jax.random.PRNGKey(0)
    kx, kp = jax.random.split(key)

    B = 2
    # Synthetic stand-in for the pooled BERT output (bert(...)[1]): [B, 768]
    x = jax.random.normal(kx, (B, 768), jnp.float32)
    params = init_params(kp)

    out = jax.block_until_ready(classification_head(x, *params))
    ref = reference(x, *params)

    assert out.shape == (B, 1)
    assert bool(jnp.all(jnp.isfinite(out)))
    assert jnp.allclose(out, ref, atol=1e-2, rtol=1e-2), (out, ref)

    print("KERNEL_OK")
</pallas_src>

<mosaic_0001>
module attributes {stable_mosaic.version = 11 : i64} {
  func.func @head_kernel(%arg0: i32, %arg1: memref<8x768xbf16, #tpu.memory_space<vmem>>, %arg2: memref<768x256xbf16, #tpu.memory_space<vmem>>, %arg3: memref<1x256xf32, #tpu.memory_space<vmem>>, %arg4: memref<256x64xbf16, #tpu.memory_space<vmem>>, %arg5: memref<1x64xf32, #tpu.memory_space<vmem>>, %arg6: memref<1x64xf32, #tpu.memory_space<vmem>>, %arg7: memref<1x1xf32, #tpu.memory_space<smem>>, %arg8: memref<8x1xf32, #tpu.memory_space<vmem>>) attributes {dimension_semantics = [#tpu.dimension_semantics<parallel>], iteration_bounds = array<i64: 1>, scalar_prefetch = 0 : i64, scratch_operands = 0 : i64, tpu.core_type = #tpu.core_type<tc>, window_params = [{transform_indices = @transform_0, window_bounds = array<i64: 8, 768>}, {pipeline_mode = #tpu.pipeline_mode<synchronous>, transform_indices = @transform_1, window_bounds = array<i64: 768, 256>}, {pipeline_mode = #tpu.pipeline_mode<synchronous>, transform_indices = @transform_2, window_bounds = array<i64: 1, 256>}, {pipeline_mode = #tpu.pipeline_mode<synchronous>, transform_indices = @transform_3, window_bounds = array<i64: 256, 64>}, {pipeline_mode = #tpu.pipeline_mode<synchronous>, transform_indices = @transform_4, window_bounds = array<i64: 1, 64>}, {pipeline_mode = #tpu.pipeline_mode<synchronous>, transform_indices = @transform_5, window_bounds = array<i64: 1, 64>}, {transform_indices = @transform_6, window_bounds = array<i64: 1, 1>}, {transform_indices = @transform_7, window_bounds = array<i64: 8, 1>}]} {
    %c0 = arith.constant 0 : index
    %c0_0 = arith.constant 0 : index
    %0 = vector.load %arg1[%c0, %c0_0] : memref<8x768xbf16, #tpu.memory_space<vmem>>, vector<8x768xbf16>
    %c0_1 = arith.constant 0 : index
    %c0_2 = arith.constant 0 : index
    %1 = vector.load %arg2[%c0_1, %c0_2] : memref<768x256xbf16, #tpu.memory_space<vmem>>, vector<768x256xbf16>
    %cst = arith.constant dense<0.000000e+00> : vector<8x256xf32>
    %2 = tpu.matmul %0, %1, %cst {dimension_numbers = #tpu.dot_dimension_numbers<[1], [0], [0], [1], [0, 0, 1, 1], [], []>} : vector<8x768xbf16>, vector<768x256xbf16>, vector<8x256xf32> -> vector<8x256xf32>
    %c0_3 = arith.constant 0 : index
    %c0_4 = arith.constant 0 : index
    %3 = vector.load %arg3[%c0_3, %c0_4] : memref<1x256xf32, #tpu.memory_space<vmem>>, vector<1x256xf32>
    %4 = vector.broadcast %3 : vector<1x256xf32> to vector<8x256xf32>
    %5 = arith.addf %2, %4 : vector<8x256xf32>
    %cst_5 = arith.constant 0.000000e+00 : f32
    %6 = vector.broadcast %cst_5 : f32 to vector<8x256xf32>
    %7 = arith.maximumf %5, %6 : vector<8x256xf32>
    %8 = arith.truncf %7 : vector<8x256xf32> to vector<8x256xbf16>
    %c0_6 = arith.constant 0 : index
    %c0_7 = arith.constant 0 : index
    %9 = vector.load %arg4[%c0_6, %c0_7] : memref<256x64xbf16, #tpu.memory_space<vmem>>, vector<256x64xbf16>
    %cst_8 = arith.constant dense<0.000000e+00> : vector<8x64xf32>
    %10 = tpu.matmul %8, %9, %cst_8 {dimension_numbers = #tpu.dot_dimension_numbers<[1], [0], [0], [1], [0, 0, 1, 1], [], []>} : vector<8x256xbf16>, vector<256x64xbf16>, vector<8x64xf32> -> vector<8x64xf32>
    %c0_9 = arith.constant 0 : index
    %c0_10 = arith.constant 0 : index
    %11 = vector.load %arg5[%c0_9, %c0_10] : memref<1x64xf32, #tpu.memory_space<vmem>>, vector<1x64xf32>
    %12 = vector.broadcast %11 : vector<1x64xf32> to vector<8x64xf32>
    %13 = arith.addf %10, %12 : vector<8x64xf32>
    %cst_11 = arith.constant 0.000000e+00 : f32
    %14 = vector.broadcast %cst_11 : f32 to vector<8x64xf32>
    %15 = arith.maximumf %13, %14 : vector<8x64xf32>
    %c0_12 = arith.constant 0 : index
    %c0_13 = arith.constant 0 : index
    %16 = vector.load %arg6[%c0_12, %c0_13] : memref<1x64xf32, #tpu.memory_space<vmem>>, vector<1x64xf32>
    %17 = vector.broadcast %16 : vector<1x64xf32> to vector<8x64xf32>
    %18 = arith.mulf %15, %17 : vector<8x64xf32>
    %cst_14 = arith.constant dense<0.000000e+00> : vector<8xf32>
    %19 = vector.multi_reduction <add>, %18, %cst_14 [1] : vector<8x64xf32> to vector<8xf32>
    %20 = vector.shape_cast %19 : vector<8xf32> to vector<8x1xf32>
    %c0_15 = arith.constant 0 : index
    %c0_16 = arith.constant 0 : index
    %21 = memref.load %arg7[%c0_15, %c0_16] : memref<1x1xf32, #tpu.memory_space<smem>>
    %22 = vector.broadcast %21 : f32 to vector<8x1xf32>
    %23 = arith.addf %20, %22 : vector<8x1xf32>
    %cst_17 = arith.constant 0.000000e+00 : f32
    %24 = vector.broadcast %cst_17 : f32 to vector<8x1xf32>
    %25 = arith.maximumf %23, %24 : vector<8x1xf32>
    %cst_18 = arith.constant 0.000000e+00 : f32
    %26 = vector.broadcast %cst_18 : f32 to vector<8x1xf32>
    %27 = arith.subf %26, %25 : vector<8x1xf32>
    %28 = math.exp %27 : vector<8x1xf32>
    %cst_19 = arith.constant 1.000000e+00 : f32
    %29 = vector.broadcast %cst_19 : f32 to vector<8x1xf32>
    %30 = arith.addf %29, %28 : vector<8x1xf32>
    %31 = tpu.reciprocal %30 {approx = true} : vector<8x1xf32> -> vector<8x1xf32>
    %c0_20 = arith.constant 0 : index
    %c0_21 = arith.constant 0 : index
    %32 = vector.load %arg8[%c0_20, %c0_21] : memref<8x1xf32, #tpu.memory_space<vmem>>, vector<8x1xf32>
    tpu.vector_store %arg8[%c0_20, %c0_21], %31 {strides = array<i32>} : memref<8x1xf32, #tpu.memory_space<vmem>>, vector<8x1xf32>,
    return
  }
  func.func @transform_0(%arg0: i32) -> (i32, i32) {
    %c0_i32 = arith.constant 0 : i32
    %c0_i32_0 = arith.constant 0 : i32
    return %arg0, %c0_i32 : i32, i32
  }
  func.func @transform_1(%arg0: i32) -> (i32, i32) {
    %c0_i32 = arith.constant 0 : i32
    %c0_i32_0 = arith.constant 0 : i32
    %c0_i32_1 = arith.constant 0 : i32
    return %c0_i32, %c0_i32_0 : i32, i32
  }
  func.func @transform_2(%arg0: i32) -> (i32, i32) {
    %c0_i32 = arith.constant 0 : i32
    %c0_i32_0 = arith.constant 0 : i32
    %c0_i32_1 = arith.constant 0 : i32
    return %c0_i32, %c0_i32_0 : i32, i32
  }
  func.func @transform_3(%arg0: i32) -> (i32, i32) {
    %c0_i32 = arith.constant 0 : i32
    %c0_i32_0 = arith.constant 0 : i32
    %c0_i32_1 = arith.constant 0 : i32
    return %c0_i32, %c0_i32_0 : i32, i32
  }
  func.func @transform_4(%arg0: i32) -> (i32, i32) {
    %c0_i32 = arith.constant 0 : i32
    %c0_i32_0 = arith.constant 0 : i32
    %c0_i32_1 = arith.constant 0 : i32
    return %c0_i32, %c0_i32_0 : i32, i32
  }
  func.func @transform_5(%arg0: i32) -> (i32, i32) {
    %c0_i32 = arith.constant 0 : i32
    %c0_i32_0 = arith.constant 0 : i32
    %c0_i32_1 = arith.constant 0 : i32
    return %c0_i32, %c0_i32_0 : i32, i32
  }
  func.func @transform_6(%arg0: i32) -> (i32, i32) {
    %c0_i32 = arith.constant 0 : i32
    %c0_i32_0 = arith.constant 0 : i32
    %c0_i32_1 = arith.constant 0 : i32
    return %c0_i32, %c0_i32_0 : i32, i32
  }
  func.func @transform_7(%arg0: i32) -> (i32, i32) {
    %c0_i32 = arith.constant 0 : i32
    %c0_i32_0 = arith.constant 0 : i32
    return %arg0, %c0_i32 : i32, i32
  }
}

</mosaic_0001>

<llo_original>
// kernel: tpu_custom_call.1
$region0: #{tpu_custom_call.1}
  #allocation0 [shape = 'u32[]', space=smem, size = 0x4, offset = 0x4, fixed_abs, tag = 'smem constant byte address 0x4 - core index']
  #allocation1 [shape = 'u32[144,128]{1,0:T(1,128)}', space=vmem, size = 0x12000, scoped, tag = 'internal scratch']
  #allocation2 [shape = 'f32[1,1]{1,0:T(1,128)S(6)}', space=smem, size = 0x200, scoped, tag = 'scoped memory for tpu_custom_call.1']
  %s0 = inlined_call_operand.vmem [shape: bf16[8,768], index: 0, kind: input, shape index: {}]
  %s1 = inlined_call_operand.hbm [shape: bf16[768,256], index: 1, kind: input, shape index: {}]
  %s2 = inlined_call_operand.vmem [shape: f32[1,256], index: 2, kind: input, shape index: {}]
  %s3 = inlined_call_operand.vmem [shape: bf16[256,64], index: 3, kind: input, shape index: {}]
  %s4 = inlined_call_operand.vmem [shape: f32[1,64], index: 4, kind: input, shape index: {}]
  %s5 = inlined_call_operand.vmem [shape: f32[1,64], index: 5, kind: input, shape index: {}]
  %s6 = inlined_call_operand.<no memory space> [shape: f32[1,1], index: 6, kind: input, shape index: {}]
  %s7 = inlined_call_operand.vmem [shape: f32[8,1], index: 7, kind: output, shape index: {}]
  %s8 = sld [smem:[#allocation0]]
  $region42: #{tpu_custom_call.1} parent=0
    _
  %s10 = ssub.s32 1, %s8
  %s11 = scalar_select 0, %s10, %s8
  %12 = sst [smem:[#allocation2]] %s6
  $region1: #{tpu_custom_call.1} parent=0
    #allocation3 [shape = 'u8[393216]{0}', space=vmem, size = 0x60000, scoped, tag = 'input window, operand 1, single buffered']
    #allocation4 [shape = 's32[1]{0}', space=sflag, size = 0x4, scoped, tag = 'scoped memory for tpu_custom_call.1']
    %13 = vsyncpa [#allocation4], 0
    // Predicated region
    $region2: #{tpu_custom_call.1} parent=1 // pred_check
      _
    $region3: #{tpu_custom_call.1} parent=1 // pred_check_branch
      %15 = sbr.rel (0) target = $region5
    $region4: #{tpu_custom_call.1} parent=1 // pred_region
      _
    $region5: #{tpu_custom_call.1} parent=1 // pred_fallthru
      _
    // Predicated region
    $region6: #{tpu_custom_call.1} parent=1 // pred_check
      _
    $region7: #{tpu_custom_call.1} parent=1 // pred_check_branch
      %17 = sbr.rel (0) target = $region9
    $region8: #{tpu_custom_call.1} parent=1 // pred_region
      %s19 = ssub.s32 12288, 12288
      %20 = vsyncadd [#allocation4], %s19
      %s21 = sshll.u32 [#allocation3], 4
      %s22 = int_to_ptr.vmem [resolvable:$true] %s21
      %27 = dma.hbm_to_vmem [thread:$0]  %s1, 12288, %s22, [#allocation4], 128, 128, 8
    $region9: #{tpu_custom_call.1} parent=1 // pred_fallthru
      _
    // Predicated region
    $region10: #{tpu_custom_call.1} parent=1 // pred_check
      _
    $region11: #{tpu_custom_call.1} parent=1 // pred_check_branch
      %29 = sbr.rel (0) target = $region13
    $region12: #{tpu_custom_call.1} parent=1 // pred_region
      _
    $region13: #{tpu_custom_call.1} parent=1 // pred_fallthru
      _
    // Predicated region
    $region14: #{tpu_custom_call.1} parent=1 // pred_check
      _
    $region15: #{tpu_custom_call.1} parent=1 // pred_check_branch
      %31 = sbr.rel (0) target = $region17
    $region16: #{tpu_custom_call.1} parent=1 // pred_region
      _
    $region17: #{tpu_custom_call.1} parent=1 // pred_fallthru
      _
    // Predicated region
    $region18: #{tpu_custom_call.1} parent=1 // pred_check
      _
    $region19: #{tpu_custom_call.1} parent=1 // pred_check_branch
      %33 = sbr.rel (0) target = $region21
    $region20: #{tpu_custom_call.1} parent=1 // pred_region
      _
    $region21: #{tpu_custom_call.1} parent=1 // pred_fallthru
      _
    // Predicated region
    $region22: #{tpu_custom_call.1} parent=1 // pred_check
      _
    $region23: #{tpu_custom_call.1} parent=1 // pred_check_branch
      %35 = sbr.rel (0) target = $region25
    $region24: #{tpu_custom_call.1} parent=1 // pred_region
      _
    $region25: #{tpu_custom_call.1} parent=1 // pred_fallthru
      _
    // Predicated region
    $region26: #{tpu_custom_call.1} parent=1 // pred_check
      _
    $region27: #{tpu_custom_call.1} parent=1 // pred_check_branch
      %37 = sbr.rel (0) target = $region29
    $region28: #{tpu_custom_call.1} parent=1 // pred_region
      _
    $region29: #{tpu_custom_call.1} parent=1 // pred_fallthru
      _
    // Predicated region
    $region30: #{tpu_custom_call.1} parent=1 // pred_check
      _
    $region31: #{tpu_custom_call.1} parent=1 // pred_check_branch
      %39 = sbr.rel (0) target = $region33
    $region32: #{tpu_custom_call.1} parent=1 // pred_region
      %40 = dma.done [#allocation4], 12288
    $region33: #{tpu_custom_call.1} parent=1 // pred_fallthru
      _
    %v42 = vld [vmem:[%s0] sm:$0xff]
    %v43 = vld [vmem:[%s0 + $0x8] sm:$0xff]
    %v44 = vld [vmem:[%s0 + $0x10] sm:$0xff]
    %v45 = vld [vmem:[#allocation3] sm:$0xff]
    %v46 = vld [vmem:[#allocation3 + $0x8] sm:$0xff]
    %v47 = vld [vmem:[#allocation3 + $0x10] sm:$0xff]
    %v48 = vld [vmem:[#allocation3 + $0x18] sm:$0xff]
    %v49 = vld [vmem:[#allocation3 + $0x20] sm:$0xff]
    %v50 = vld [vmem:[#allocation3 + $0x28] sm:$0xff]
    %v51 = vld [vmem:[#allocation3 + $0x30] sm:$0xff]
    %v52 = vld [vmem:[#allocation3 + $0x38] sm:$0xff]
    %v53 = vld [vmem:[#allocation3 + $0x40] sm:$0xff]
    %v54 = vld [vmem:[#allocation3 + $0x48] sm:$0xff]
    %v55 = vld [vmem:[#allocation3 + $0x50] sm:$0xff]
    %v56 = vld [vmem:[#allocation3 + $0x58] sm:$0xff]
    %v57 = vld [vmem:[#allocation3 + $0x60] sm:$0xff]
    %v58 = vld [vmem:[#allocation3 + $0x68] sm:$0xff]
    %v59 = vld [vmem:[#allocation3 + $0x70] sm:$0xff]
    %v60 = vld [vmem:[#allocation3 + $0x78] sm:$0xff]
    %v61 = vld [vmem:[#allocation3 + $0x80] sm:$0xff]
    %v62 = vld [vmem:[#allocation3 + $0x88] sm:$0xff]
    %v63 = vld [vmem:[#allocation3 + $0x90] sm:$0xff]
    %v64 = vld [vmem:[#allocation3 + $0x98] sm:$0xff]
    %v65 = vld [vmem:[#allocation3 + $0xa0] sm:$0xff]
    %v66 = vld [vmem:[#allocation3 + $0xa8] sm:$0xff]
    %v67 = vld [vmem:[#allocation3 + $0xb0] sm:$0xff]
    %v68 = vld [vmem:[#allocation3 + $0xb8] sm:$0xff]
    %v69 = vld [vmem:[#allocation3 + $0xc0] sm:$0xff]
    %v70 = vld [vmem:[#allocation3 + $0xc8] sm:$0xff]
    %v71 = vld [vmem:[#allocation3 + $0xd0] sm:$0xff]
    %v72 = vld [vmem:[#allocation3 + $0xd8] sm:$0xff]
    %v73 = vld [vmem:[#allocation3 + $0xe0] sm:$0xff]
    %v74 = vld [vmem:[#allocation3 + $0xe8] sm:$0xff]
    %v75 = vld [vmem:[#allocation3 + $0xf0] sm:$0xff]
    %v76 = vld [vmem:[#allocation3 + $0xf8] sm:$0xff]
    %v77 = vld [vmem:[#allocation3 + $0x100] sm:$0xff]
    %v78 = vld [vmem:[#allocation3 + $0x108] sm:$0xff]
    %v79 = vld [vmem:[#allocation3 + $0x110] sm:$0xff]
    %v80 = vld [vmem:[#allocation3 + $0x118] sm:$0xff]
    %v81 = vld [vmem:[#allocation3 + $0x120] sm:$0xff]
    %v82 = vld [vmem:[#allocation3 + $0x128] sm:$0xff]
    %v83 = vld [vmem:[#allocation3 + $0x130] sm:$0xff]
    %v84 = vld [vmem:[#allocation3 + $0x138] sm:$0xff]
    %v85 = vld [vmem:[#allocation3 + $0x140] sm:$0xff]
    %v86 = vld [vmem:[#allocation3 + $0x148] sm:$0xff]
    %v87 = vld [vmem:[#allocation3 + $0x150] sm:$0xff]
    %v88 = vld [vmem:[#allocation3 + $0x158] sm:$0xff]
    %v89 = vld [vmem:[#allocation3 + $0x160] sm:$0xff]
    %v90 = vld [vmem:[#allocation3 + $0x168] sm:$0xff]
    %v91 = vld [vmem:[#allocation3 + $0x170] sm:$0xff]
    %v92 = vld [vmem:[#allocation3 + $0x178] sm:$0xff]
    %v93 = vld [vmem:[#allocation3 + $0x180] sm:$0xff]
    %v94 = vld [vmem:[#allocation3 + $0x188] sm:$0xff]
    %v95 = vld [vmem:[#allocation3 + $0x190] sm:$0xff]
    %v96 = vld [vmem:[#allocation3 + $0x198] sm:$0xff]
    %v97 = vld [vmem:[#allocation3 + $0x1a0] sm:$0xff]
    %v98 = vld [vmem:[#allocation3 + $0x1a8] sm:$0xff]
    %v99 = vld [vmem:[#allocation3 + $0x1b0] sm:$0xff]
    %v100 = vld [vmem:[#allocation3 + $0x1b8] sm:$0xff]
    %v101 = vld [vmem:[#allocation3 + $0x1c0] sm:$0xff]
    %v102 = vld [vmem:[#allocation3 + $0x1c8] sm:$0xff]
    %v103 = vld [vmem:[#allocation3 + $0x1d0] sm:$0xff]
    %v104 = vld [vmem:[#allocation3 + $0x1d8] sm:$0xff]
    %v105 = vld [vmem:[#allocation3 + $0x1e0] sm:$0xff]
    %v106 = vld [vmem:[#allocation3 + $0x1e8] sm:$0xff]
    %v107 = vld [vmem:[#allocation3 + $0x1f0] sm:$0xff]
    %v108 = vld [vmem:[#allocation3 + $0x1f8] sm:$0xff]
    %v109 = vld [vmem:[#allocation3 + $0x200] sm:$0xff]
    %v110 = vld [vmem:[#allocation3 + $0x208] sm:$0xff]
    %v111 = vld [vmem:[#allocation3 + $0x210] sm:$0xff]
    %v112 = vld [vmem:[#allocation3 + $0x218] sm:$0xff]
    %v113 = vld [vmem:[#allocation3 + $0x220] sm:$0xff]
    %v114 = vld [vmem:[#allocation3 + $0x228] sm:$0xff]
    %v115 = vld [vmem:[#allocation3 + $0x230] sm:$0xff]
    %v116 = vld [vmem:[#allocation3 + $0x238] sm:$0xff]
    %v117 = vld [vmem:[#allocation3 + $0x240] sm:$0xff]
    %v118 = vld [vmem:[#allocation3 + $0x248] sm:$0xff]
    %v119 = vld [vmem:[#allocation3 + $0x250] sm:$0xff]
    %v120 = vld [vmem:[#allocation3 + $0x258] sm:$0xff]
    %v121 = vld [vmem:[#allocation3 + $0x260] sm:$0xff]
    %v122 = vld [vmem:[#allocation3 + $0x268] sm:$0xff]
    %v123 = vld [vmem:[#allocation3 + $0x270] sm:$0xff]
    %v124 = vld [vmem:[#allocation3 + $0x278] sm:$0xff]
    %v125 = vld [vmem:[#allocation3 + $0x280] sm:$0xff]
    %v126 = vld [vmem:[#allocation3 + $0x288] sm:$0xff]
    %v127 = vld [vmem:[#allocation3 + $0x290] sm:$0xff]
    %v128 = vld [vmem:[#allocation3 + $0x298] sm:$0xff]
    %v129 = vld [vmem:[#allocation3 + $0x2a0] sm:$0xff]
    %v130 = vld [vmem:[#allocation3 + $0x2a8] sm:$0xff]
    %v131 = vld [vmem:[#allocation3 + $0x2b0] sm:$0xff]
    %v132 = vld [vmem:[#allocation3 + $0x2b8] sm:$0xff]
    %v133 = vld [vmem:[#allocation3 + $0x2c0] sm:$0xff]
    %v134 = vld [vmem:[#allocation3 + $0x2c8] sm:$0xff]
    %v135 = vld [vmem:[#allocation3 + $0x2d0] sm:$0xff]
    %v136 = vld [vmem:[#allocation3 + $0x2d8] sm:$0xff]
    %v137 = vld [vmem:[#allocation3 + $0x2e0] sm:$0xff]
    %v138 = vld [vmem:[#allocation3 + $0x2e8] sm:$0xff]
    %v139 = vld [vmem:[#allocation3 + $0x2f0] sm:$0xff]
    %v140 = vld [vmem:[#allocation3 + $0x2f8] sm:$0xff]
    %v141 = vld [vmem:[%s2] sm:$0x3]
    %v143 = vlaneseq
    %v144 = vshrl.u32 %v143, 7
    %v145 = vsub.s32 0, %v144
    %v146 = vrot.slane %v141, %v145
    %v147 = vlaneseq
    %v148 = vshrl.u32 %v147, 7
    %v149 = vsub.s32 1, %v148
    %v150 = vrot.slane %v141, %v149
    %v156 = vunpack.c.l.b16 %v42
    %v157 = vunpack.c.h.b16 %v42
    %v158 = vunpack.c.l.b16 %v43
    %v159 = vunpack.c.h.b16 %v43
    %v160 = vunpack.c.l.b16 %v44
    %v161 = vunpack.c.h.b16 %v44
    %v162 = vpack.c.b16 %v156, %v156
    %v163 = vpack.c.b16 %v157, %v157
    %v164 = vpack.c.b16 %v158, %v158
    %v165 = vpack.c.b16 %v159, %v159
    %v166 = vpack.c.b16 %v160, %v160
    %v167 = vpack.c.b16 %v161, %v161
    %v270 = vunpack.c.l.b16 %v45
    %v271 = vunpack.c.h.b16 %v45
    %v272 = vunpack.c.l.b16 %v46
    %v273 = vunpack.c.h.b16 %v46
    %v274 = vunpack.c.l.b16 %v47
    %v275 = vunpack.c.h.b16 %v47
    %v276 = vunpack.c.l.b16 %v48
    %v277 = vunpack.c.h.b16 %v48
    %v278 = vunpack.c.l.b16 %v49
    %v279 = vunpack.c.h.b16 %v49
    %v280 = vunpack.c.l.b16 %v50
    %v281 = vunpack.c.h.b16 %v50
    %v282 = vunpack.c.l.b16 %v51
    %v283 = vunpack.c.h.b16 %v51
    %v284 = vunpack.c.l.b16 %v52
    %v285 = vunpack.c.h.b16 %v52
    %v286 = vunpack.c.l.b16 %v53
    %v287 = vunpack.c.h.b16 %v53
    %v288 = vunpack.c.l.b16 %v54
    %v289 = vunpack.c.h.b16 %v54
    %v290 = vunpack.c.l.b16 %v55
    %v291 = vunpack.c.h.b16 %v55
    %v292 = vunpack.c.l.b16 %v56
    %v293 = vunpack.c.h.b16 %v56
    %v294 = vunpack.c.l.b16 %v57
    %v295 = vunpack.c.h.b16 %v57
    %v296 = vunpack.c.l.b16 %v58
    %v297 = vunpack.c.h.b16 %v58
    %v298 = vunpack.c.l.b16 %v59
    %v299 = vunpack.c.h.b16 %v59
    %v300 = vunpack.c.l.b16 %v60
    %v301 = vunpack.c.h.b16 %v60
    %v302 = vunpack.c.l.b16 %v61
    %v303 = vunpack.c.h.b16 %v61
    %v304 = vunpack.c.l.b16 %v62
    %v305 = vunpack.c.h.b16 %v62
    %v306 = vunpack.c.l.b16 %v63
    %v307 = vunpack.c.h.b16 %v63
    %v308 = vunpack.c.l.b16 %v64
    %v309 = vunpack.c.h.b16 %v64
    %v310 = vunpack.c.l.b16 %v65
    %v311 = vunpack.c.h.b16 %v65
    %v312 = vunpack.c.l.b16 %v66
    %v313 = vunpack.c.h.b16 %v66
    %v314 = vunpack.c.l.b16 %v67
    %v315 = vunpack.c.h.b16 %v67
    %v316 = vunpack.c.l.b16 %v68
    %v317 = vunpack.c.h.b16 %v68
    %v318 = vunpack.c.l.b16 %v69
    %v319 = vunpack.c.h.b16 %v69
    %v320 = vunpack.c.l.b16 %v70
    %v321 = vunpack.c.h.b16 %v70
    %v322 = vunpack.c.l.b16 %v71
    %v323 = vunpack.c.h.b16 %v71
    %v324 = vunpack.c.l.b16 %v72
    %v325 = vunpack.c.h.b16 %v72
    %v326 = vunpack.c.l.b16 %v73
    %v327 = vunpack.c.h.b16 %v73
    %v328 = vunpack.c.l.b16 %v74
    %v329 = vunpack.c.h.b16 %v74
    %v330 = vunpack.c.l.b16 %v75
    %v331 = vunpack.c.h.b16 %v75
    %v332 = vunpack.c.l.b16 %v76
    %v333 = vunpack.c.h.b16 %v76
    %v334 = vunpack.c.l.b16 %v77
    %v335 = vunpack.c.h.b16 %v77
    %v336 = vunpack.c.l.b16 %v78
    %v337 = vunpack.c.h.b16 %v78
    %v338 = vunpack.c.l.b16 %v79
    %v339 = vunpack.c.h.b16 %v79
    %v340 = vunpack.c.l.b16 %v80
    %v341 = vunpack.c.h.b16 %v80
    %v342 = vunpack.c.l.b16 %v81
    %v343 = vunpack.c.h.b16 %v81
    %v344 = vunpack.c.l.b16 %v82
    %v345 = vunpack.c.h.b16 %v82
    %v346 = vunpack.c.l.b16 %v83
    %v347 = vunpack.c.h.b16 %v83
    %v348 = vunpack.c.l.b16 %v84
    %v349 = vunpack.c.h.b16 %v84
    %v350 = vunpack.c.l.b16 %v85
    %v351 = vunpack.c.h.b16 %v85
    %v352 = vunpack.c.l.b16 %v86
    %v353 = vunpack.c.h.b16 %v86
    %v354 = vunpack.c.l.b16 %v87
    %v355 = vunpack.c.h.b16 %v87
    %v356 = vunpack.c.l.b16 %v88
    %v357 = vunpack.c.h.b16 %v88
    %v358 = vunpack.c.l.b16 %v89
    %v359 = vunpack.c.h.b16 %v89
    %v360 = vunpack.c.l.b16 %v90
    %v361 = vunpack.c.h.b16 %v90
    %v362 = vunpack.c.l.b16 %v91
    %v363 = vunpack.c.h.b16 %v91
    %v364 = vunpack.c.l.b16 %v92
    %v365 = vunpack.c.h.b16 %v92
    %v366 = vunpack.c.l.b16 %v93
    %v367 = vunpack.c.h.b16 %v93
    %v368 = vunpack.c.l.b16 %v94
    %v369 = vunpack.c.h.b16 %v94
    %v370 = vunpack.c.l.b16 %v95
    %v371 = vunpack.c.h.b16 %v95
    %v372 = vunpack.c.l.b16 %v96
    %v373 = vunpack.c.h.b16 %v96
    %v374 = vunpack.c.l.b16 %v97
    %v375 = vunpack.c.h.b16 %v97
    %v376 = vunpack.c.l.b16 %v98
    %v377 = vunpack.c.h.b16 %v98
    %v378 = vunpack.c.l.b16 %v99
    %v379 = vunpack.c.h.b16 %v99
    %v380 = vunpack.c.l.b16 %v100
    %v381 = vunpack.c.h.b16 %v100
    %v382 = vunpack.c.l.b16 %v101
    %v383 = vunpack.c.h.b16 %v101
    %v384 = vunpack.c.l.b16 %v102
    %v385 = vunpack.c.h.b16 %v102
    %v386 = vunpack.c.l.b16 %v103
    %v387 = vunpack.c.h.b16 %v103
    %v388 = vunpack.c.l.b16 %v104
    %v389 = vunpack.c.h.b16 %v104
    %v390 = vunpack.c.l.b16 %v105
    %v391 = vunpack.c.h.b16 %v105
    %v392 = vunpack.c.l.b16 %v106
    %v393 = vunpack.c.h.b16 %v106
    %v394 = vunpack.c.l.b16 %v107
    %v395 = vunpack.c.h.b16 %v107
    %v396 = vunpack.c.l.b16 %v108
    %v397 = vunpack.c.h.b16 %v108
    %v398 = vunpack.c.l.b16 %v109
    %v399 = vunpack.c.h.b16 %v109
    %v400 = vunpack.c.l.b16 %v110
    %v401 = vunpack.c.h.b16 %v110
    %v402 = vunpack.c.l.b16 %v111
    %v403 = vunpack.c.h.b16 %v111
    %v404 = vunpack.c.l.b16 %v112
    %v405 = vunpack.c.h.b16 %v112
    %v406 = vunpack.c.l.b16 %v113
    %v407 = vunpack.c.h.b16 %v113
    %v408 = vunpack.c.l.b16 %v114
    %v409 = vunpack.c.h.b16 %v114
    %v410 = vunpack.c.l.b16 %v115
    %v411 = vunpack.c.h.b16 %v115
    %v412 = vunpack.c.l.b16 %v116
    %v413 = vunpack.c.h.b16 %v116
    %v414 = vunpack.c.l.b16 %v117
    %v415 = vunpack.c.h.b16 %v117
    %v416 = vunpack.c.l.b16 %v118
    %v417 = vunpack.c.h.b16 %v118
    %v418 = vunpack.c.l.b16 %v119
    %v419 = vunpack.c.h.b16 %v119
    %v420 = vunpack.c.l.b16 %v120
    %v421 = vunpack.c.h.b16 %v120
    %v422 = vunpack.c.l.b16 %v121
    %v423 = vunpack.c.h.b16 %v121
    %v424 = vunpack.c.l.b16 %v122
    %v425 = vunpack.c.h.b16 %v122
    %v426 = vunpack.c.l.b16 %v123
    %v427 = vunpack.c.h.b16 %v123
    %v428 = vunpack.c.l.b16 %v124
    %v429 = vunpack.c.h.b16 %v124
    %v430 = vunpack.c.l.b16 %v125
    %v431 = vunpack.c.h.b16 %v125
    %v432 = vunpack.c.l.b16 %v126
    %v433 = vunpack.c.h.b16 %v126
    %v434 = vunpack.c.l.b16 %v127
    %v435 = vunpack.c.h.b16 %v127
    %v436 = vunpack.c.l.b16 %v128
    %v437 = vunpack.c.h.b16 %v128
    %v438 = vunpack.c.l.b16 %v129
    %v439 = vunpack.c.h.b16 %v129
    %v440 = vunpack.c.l.b16 %v130
    %v441 = vunpack.c.h.b16 %v130
    %v442 = vunpack.c.l.b16 %v131
    %v443 = vunpack.c.h.b16 %v131
    %v444 = vunpack.c.l.b16 %v132
    %v445 = vunpack.c.h.b16 %v132
    %v446 = vunpack.c.l.b16 %v133
    %v447 = vunpack.c.h.b16 %v133
    %v448 = vunpack.c.l.b16 %v134
    %v449 = vunpack.c.h.b16 %v134
    %v450 = vunpack.c.l.b16 %v135
    %v451 = vunpack.c.h.b16 %v135
    %v452 = vunpack.c.l.b16 %v136
    %v453 = vunpack.c.h.b16 %v136
    %v454 = vunpack.c.l.b16 %v137
    %v455 = vunpack.c.h.b16 %v137
    %v456 = vunpack.c.l.b16 %v138
    %v457 = vunpack.c.h.b16 %v138
    %v458 = vunpack.c.l.b16 %v139
    %v459 = vunpack.c.h.b16 %v139
    %v460 = vunpack.c.l.b16 %v140
    %v461 = vunpack.c.h.b16 %v140
    %v462 = vpack.c.b16 %v272, %v270
    %v463 = vpack.c.b16 %v273, %v271
    %v464 = vpack.c.b16 %v276, %v274
    %v465 = vpack.c.b16 %v277, %v275
    %v466 = vpack.c.b16 %v280, %v278
    %v467 = vpack.c.b16 %v281, %v279
    %v468 = vpack.c.b16 %v284, %v282
    %v469 = vpack.c.b16 %v285, %v283
    %v470 = vpack.c.b16 %v288, %v286
    %v471 = vpack.c.b16 %v289, %v287
    %v472 = vpack.c.b16 %v292, %v290
    %v473 = vpack.c.b16 %v293, %v291
    %v474 = vpack.c.b16 %v296, %v294
    %v475 = vpack.c.b16 %v297, %v295
    %v476 = vpack.c.b16 %v300, %v298
    %v477 = vpack.c.b16 %v301, %v299
    %v478 = vpack.c.b16 %v304, %v302
    %v479 = vpack.c.b16 %v305, %v303
    %v480 = vpack.c.b16 %v308, %v306
    %v481 = vpack.c.b16 %v309, %v307
    %v482 = vpack.c.b16 %v312, %v310
    %v483 = vpack.c.b16 %v313, %v311
    %v484 = vpack.c.b16 %v316, %v314
    %v485 = vpack.c.b16 %v317, %v315
    %v486 = vpack.c.b16 %v320, %v318
    %v487 = vpack.c.b16 %v321, %v319
    %v488 = vpack.c.b16 %v324, %v322
    %v489 = vpack.c.b16 %v325, %v323
    %v490 = vpack.c.b16 %v328, %v326
    %v491 = vpack.c.b16 %v329, %v327
    %v492 = vpack.c.b16 %v332, %v330
    %v493 = vpack.c.b16 %v333, %v331
    %v494 = vpack.c.b16 %v336, %v334
    %v495 = vpack.c.b16 %v337, %v335
    %v496 = vpack.c.b16 %v340, %v338
    %v497 = vpack.c.b16 %v341, %v339
    %v498 = vpack.c.b16 %v344, %v342
    %v499 = vpack.c.b16 %v345, %v343
    %v500 = vpack.c.b16 %v348, %v346
    %v501 = vpack.c.b16 %v349, %v347
    %v502 = vpack.c.b16 %v352, %v350
    %v503 = vpack.c.b16 %v353, %v351
    %v504 = vpack.c.b16 %v356, %v354
    %v505 = vpack.c.b16 %v357, %v355
    %v506 = vpack.c.b16 %v360, %v358
    %v507 = vpack.c.b16 %v361, %v359
    %v508 = vpack.c.b16 %v364, %v362
    %v509 = vpack.c.b16 %v365, %v363
    %v510 = vpack.c.b16 %v368, %v366
    %v511 = vpack.c.b16 %v369, %v367
    %v512 = vpack.c.b16 %v372, %v370
    %v513 = vpack.c.b16 %v373, %v371
    %v514 = vpack.c.b16 %v376, %v374
    %v515 = vpack.c.b16 %v377, %v375
    %v516 = vpack.c.b16 %v380, %v378
    %v517 = vpack.c.b16 %v381, %v379
    %v518 = vpack.c.b16 %v384, %v382
    %v519 = vpack.c.b16 %v385, %v383
    %v520 = vpack.c.b16 %v388, %v386
    %v521 = vpack.c.b16 %v389, %v387
    %v522 = vpack.c.b16 %v392, %v390
    %v523 = vpack.c.b16 %v393, %v391
    %v524 = vpack.c.b16 %v396, %v394
    %v525 = vpack.c.b16 %v397, %v395
    %v526 = vpack.c.b16 %v400, %v398
    %v527 = vpack.c.b16 %v401, %v399
    %v528 = vpack.c.b16 %v404, %v402
    %v529 = vpack.c.b16 %v405, %v403
    %v530 = vpack.c.b16 %v408, %v406
    %v531 = vpack.c.b16 %v409, %v407
    %v532 = vpack.c.b16 %v412, %v410
    %v533 = vpack.c.b16 %v413, %v411
    %v534 = vpack.c.b16 %v416, %v414
    %v535 = vpack.c.b16 %v417, %v415
    %v536 = vpack.c.b16 %v420, %v418
    %v537 = vpack.c.b16 %v421, %v419
    %v538 = vpack.c.b16 %v424, %v422
    %v539 = vpack.c.b16 %v425, %v423
    %v540 = vpack.c.b16 %v428, %v426
    %v541 = vpack.c.b16 %v429, %v427
    %v542 = vpack.c.b16 %v432, %v430
    %v543 = vpack.c.b16 %v433, %v431
    %v544 = vpack.c.b16 %v436, %v434
    %v545 = vpack.c.b16 %v437, %v435
    %v546 = vpack.c.b16 %v440, %v438
    %v547 = vpack.c.b16 %v441, %v439
    %v548 = vpack.c.b16 %v444, %v442
    %v549 = vpack.c.b16 %v445, %v443
    %v550 = vpack.c.b16 %v448, %v446
    %v551 = vpack.c.b16 %v449, %v447
    %v552 = vpack.c.b16 %v452, %v450
    %v553 = vpack.c.b16 %v453, %v451
    %v554 = vpack.c.b16 %v456, %v454
    %v555 = vpack.c.b16 %v457, %v455
    %v556 = vpack.c.b16 %v460, %v458
    %v557 = vpack.c.b16 %v461, %v459
    %654 = vmatprep.subr.bf16.mxu0 %v463
    %655 = vmatpush1.bf16.msra.mxu0 %v462
    %656 = vmatprep.subr.bf16.mxu0 %v465
    %657 = vmatpush1.bf16.msra.mxu0 %v464
    %658 = vmatprep.subr.bf16.mxu0 %v467
    %659 = vmatpush1.bf16.msra.mxu0 %v466
    %660 = vmatprep.subr.bf16.mxu0 %v469
    %661 = vmatpush1.bf16.msra.mxu0 %v468
    %662 = vmatprep.subr.bf16.mxu0 %v471
    %663 = vmatpush1.bf16.msra.mxu0 %v470
    %664 = vmatprep.subr.bf16.mxu0 %v473
    %665 = vmatpush1.bf16.msra.mxu0 %v472
    %666 = vmatprep.subr.bf16.mxu0 %v475
    %667 = vmatpush1.bf16.msra.mxu0 %v474
    %668 = vmatprep.subr.bf16.mxu0 %v477
    %669 = vmatpush1.bf16.msra.mxu0 %v476
    %670 = vmatprep.subr.bf16.mxu0 %v479
    %671 = vmatpush1.bf16.msra.mxu0 %v478
    %672 = vmatprep.subr.bf16.mxu0 %v481
    %673 = vmatpush1.bf16.msra.mxu0 %v480
    %674 = vmatprep.subr.bf16.mxu0 %v483
    %675 = vmatpush1.bf16.msra.mxu0 %v482
    %676 = vmatprep.subr.bf16.mxu0 %v485
    %677 = vmatpush1.bf16.msra.mxu0 %v484
    %678 = vmatprep.subr.bf16.mxu0 %v487
    %679 = vmatpush1.bf16.msra.mxu0 %v486
    %680 = vmatprep.subr.bf16.mxu0 %v489
    %681 = vmatpush1.bf16.msra.mxu0 %v488
    %682 = vmatprep.subr.bf16.mxu0 %v491
    %683 = vmatpush1.bf16.msra.mxu0 %v490
    %684 = vmatprep.subr.bf16.mxu0 %v493
    %685 = vmatpush1.bf16.msra.mxu0 %v492
    %686 = vmatprep.mubr.bf16.mxu0 %v163
    %687 = vmatmul.mubr.bf16.gmra.mrb[0].mxu0 %v162
    %v688 = vpop.f32.mrb[0].mxu0
    %v689 = vadd.f32 %v146, %v688
    %v690 = vpop.f32.mrb[0].mxu0
    %v691 = vadd.f32 %v150, %v690
    %v692 = vpop.f32.mrb[0].mxu0
    %v693 = vpop.f32.mrb[0].mxu0
    %694 = vdwg.mxu0
    %695 = vmatprep.subr.bf16.mxu0 %v495
    %696 = vmatpush1.bf16.msra.mxu0 %v494
    %697 = vmatprep.subr.bf16.mxu0 %v497
    %698 = vmatpush1.bf16.msra.mxu0 %v496
    %699 = vmatprep.subr.bf16.mxu0 %v499
    %700 = vmatpush1.bf16.msra.mxu0 %v498
    %701 = vmatprep.subr.bf16.mxu0 %v501
    %702 = vmatpush1.bf16.msra.mxu0 %v500
    %703 = vmatprep.subr.bf16.mxu0 %v503
    %704 = vmatpush1.bf16.msra.mxu0 %v502
    %705 = vmatprep.subr.bf16.mxu0 %v505
    %706 = vmatpush1.bf16.msra.mxu0 %v504
    %707 = vmatprep.subr.bf16.mxu0 %v507
    %708 = vmatpush1.bf16.msra.mxu0 %v506
    %709 = vmatprep.subr.bf16.mxu0 %v509
    %710 = vmatpush1.bf16.msra.mxu0 %v508
    %711 = vmatprep.subr.bf16.mxu0 %v511
    %712 = vmatpush1.bf16.msra.mxu0 %v510
    %713 = vmatprep.subr.bf16.mxu0 %v513
    %714 = vmatpush1.bf16.msra.mxu0 %v512
    %715 = vmatprep.subr.bf16.mxu0 %v515
    %716 = vmatpush1.bf16.msra.mxu0 %v514
    %717 = vmatprep.subr.bf16.mxu0 %v517
    %718 = vmatpush1.bf16.msra.mxu0 %v516
    %719 = vmatprep.subr.bf16.mxu0 %v519
    %720 = vmatpush1.bf16.msra.mxu0 %v518
    %721 = vmatprep.subr.bf16.mxu0 %v521
    %722 = vmatpush1.bf16.msra.mxu0 %v520
    %723 = vmatprep.subr.bf16.mxu0 %v523
    %724 = vmatpush1.bf16.msra.mxu0 %v522
    %725 = vmatprep.subr.bf16.mxu0 %v525
    %726 = vmatpush1.bf16.msra.mxu0 %v524
    %727 = vmatprep.mubr.bf16.mxu0 %v165
    %728 = vmatmul.mubr.bf16.gmra.mrb[0].mxu0 %v164
    %v729 = vpop.f32.mrb[0].mxu0
    %v730 = vadd.f32 %v689, %v729
    %v731 = vpop.f32.mrb[0].mxu0
    %v732 = vadd.f32 %v691, %v731
    %v733 = vpop.f32.mrb[0].mxu0
    %v734 = vpop.f32.mrb[0].mxu0
    %735 = vdwg.mxu0
    %736 = vmatprep.subr.bf16.mxu0 %v527
    %737 = vmatpush1.bf16.msra.mxu0 %v526
    %738 = vmatprep.subr.bf16.mxu0 %v529
    %739 = vmatpush1.bf16.msra.mxu0 %v528
    %740 = vmatprep.subr.bf16.mxu0 %v531
    %741 = vmatpush1.bf16.msra.mxu0 %v530
    %742 = vmatprep.subr.bf16.mxu0 %v533
    %743 = vmatpush1.bf16.msra.mxu0 %v532
    %744 = vmatprep.subr.bf16.mxu0 %v535
    %745 = vmatpush1.bf16.msra.mxu0 %v534
    %746 = vmatprep.subr.bf16.mxu0 %v537
    %747 = vmatpush1.bf16.msra.mxu0 %v536
    %748 = vmatprep.subr.bf16.mxu0 %v539
    %749 = vmatpush1.bf16.msra.mxu0 %v538
    %750 = vmatprep.subr.bf16.mxu0 %v541
    %751 = vmatpush1.bf16.msra.mxu0 %v540
    %752 = vmatprep.subr.bf16.mxu0 %v543
    %753 = vmatpush1.bf16.msra.mxu0 %v542
    %754 = vmatprep.subr.bf16.mxu0 %v545
    %755 = vmatpush1.bf16.msra.mxu0 %v544
    %756 = vmatprep.subr.bf16.mxu0 %v547
    %757 = vmatpush1.bf16.msra.mxu0 %v546
    %758 = vmatprep.subr.bf16.mxu0 %v549
    %759 = vmatpush1.bf16.msra.mxu0 %v548
    %760 = vmatprep.subr.bf16.mxu0 %v551
    %761 = vmatpush1.bf16.msra.mxu0 %v550
    %762 = vmatprep.subr.bf16.mxu0 %v553
    %763 = vmatpush1.bf16.msra.mxu0 %v552
    %764 = vmatprep.subr.bf16.mxu0 %v555
    %765 = vmatpush1.bf16.msra.mxu0 %v554
    %766 = vmatprep.subr.bf16.mxu0 %v557
    %767 = vmatpush1.bf16.msra.mxu0 %v556
    %768 = vmatprep.mubr.bf16.mxu0 %v167
    %769 = vmatmul.mubr.bf16.gmra.mrb[0].mxu0 %v166
    %v770 = vpop.f32.mrb[0].mxu0
    %v771 = vadd.f32 %v730, %v770
    %v772 = vpop.f32.mrb[0].mxu0
    %v773 = vadd.f32 %v732, %v772
    %v774 = vpop.f32.mrb[0].mxu0
    %v775 = vpop.f32.mrb[0].mxu0
    %776 = vdwg.mxu0
    %v777 = vmax.f32 %v771, 0.0
    %v778 = vmax.f32 %v773, 0.0
    %v779 = vpack.c.bf16 %v777, %v777
    %v780 = vpack.c.bf16 %v778, %v778
    %v781 = vld [vmem:[%s3] sm:$0xf]
    %v782 = vld [vmem:[%s3 + $0x4] sm:$0xf]
    %v783 = vld [vmem:[%s3 + $0x8] sm:$0xf]
    %v784 = vld [vmem:[%s3 + $0xc] sm:$0xf]
    %v785 = vld [vmem:[%s3 + $0x10] sm:$0xf]
    %v786 = vld [vmem:[%s3 + $0x14] sm:$0xf]
    %v787 = vld [vmem:[%s3 + $0x18] sm:$0xf]
    %v788 = vld [vmem:[%s3 + $0x1c] sm:$0xf]
    %v789 = vld [vmem:[%s3 + $0x20] sm:$0xf]
    %v790 = vld [vmem:[%s3 + $0x24] sm:$0xf]
    %v791 = vld [vmem:[%s3 + $0x28] sm:$0xf]
    %v792 = vld [vmem:[%s3 + $0x2c] sm:$0xf]
    %v793 = vld [vmem:[%s3 + $0x30] sm:$0xf]
    %v794 = vld [vmem:[%s3 + $0x34] sm:$0xf]
    %v795 = vld [vmem:[%s3 + $0x38] sm:$0xf]
    %v796 = vld [vmem:[%s3 + $0x3c] sm:$0xf]
    %v797 = vld [vmem:[%s3 + $0x40] sm:$0xf]
    %v798 = vld [vmem:[%s3 + $0x44] sm:$0xf]
    %v799 = vld [vmem:[%s3 + $0x48] sm:$0xf]
    %v800 = vld [vmem:[%s3 + $0x4c] sm:$0xf]
    %v801 = vld [vmem:[%s3 + $0x50] sm:$0xf]
    %v802 = vld [vmem:[%s3 + $0x54] sm:$0xf]
    %v803 = vld [vmem:[%s3 + $0x58] sm:$0xf]
    %v804 = vld [vmem:[%s3 + $0x5c] sm:$0xf]
    %v805 = vld [vmem:[%s3 + $0x60] sm:$0xf]
    %v806 = vld [vmem:[%s3 + $0x64] sm:$0xf]
    %v807 = vld [vmem:[%s3 + $0x68] sm:$0xf]
    %v808 = vld [vmem:[%s3 + $0x6c] sm:$0xf]
    %v809 = vld [vmem:[%s3 + $0x70] sm:$0xf]
    %v810 = vld [vmem:[%s3 + $0x74] sm:$0xf]
    %v811 = vld [vmem:[%s3 + $0x78] sm:$0xf]
    %v812 = vld [vmem:[%s3 + $0x7c] sm:$0xf]
    %v813 = vld [vmem:[%s4] sm:$0x1]
    %v815 = vlaneseq
    %v816 = vshrl.u32 %v815, 7
    %v817 = vsub.s32 0, %v816
    %v818 = vrot.slane %v813, %v817
    %v852 = vunpack.c.l.b16 %v781
    %v853 = vunpack.c.l.b16 %v782
    %v854 = vunpack.c.l.b16 %v783
    %v855 = vunpack.c.l.b16 %v784
    %v856 = vunpack.c.l.b16 %v785
    %v857 = vunpack.c.l.b16 %v786
    %v858 = vunpack.c.l.b16 %v787
    %v859 = vunpack.c.l.b16 %v788
    %v860 = vunpack.c.l.b16 %v789
    %v861 = vunpack.c.l.b16 %v790
    %v862 = vunpack.c.l.b16 %v791
    %v863 = vunpack.c.l.b16 %v792
    %v864 = vunpack.c.l.b16 %v793
    %v865 = vunpack.c.l.b16 %v794
    %v866 = vunpack.c.l.b16 %v795
    %v867 = vunpack.c.l.b16 %v796
    %v868 = vunpack.c.l.b16 %v797
    %v869 = vunpack.c.l.b16 %v798
    %v870 = vunpack.c.l.b16 %v799
    %v871 = vunpack.c.l.b16 %v800
    %v872 = vunpack.c.l.b16 %v801
    %v873 = vunpack.c.l.b16 %v802
    %v874 = vunpack.c.l.b16 %v803
    %v875 = vunpack.c.l.b16 %v804
    %v876 = vunpack.c.l.b16 %v805
    %v877 = vunpack.c.l.b16 %v806
    %v878 = vunpack.c.l.b16 %v807
    %v879 = vunpack.c.l.b16 %v808
    %v880 = vunpack.c.l.b16 %v809
    %v881 = vunpack.c.l.b16 %v810
    %v882 = vunpack.c.l.b16 %v811
    %v883 = vunpack.c.l.b16 %v812
    %v884 = vpack.c.b16 %v853, %v852
    %v885 = vpack.c.b16 %v855, %v854
    %v886 = vpack.c.b16 %v857, %v856
    %v887 = vpack.c.b16 %v859, %v858
    %v888 = vpack.c.b16 %v861, %v860
    %v889 = vpack.c.b16 %v863, %v862
    %v890 = vpack.c.b16 %v865, %v864
    %v891 = vpack.c.b16 %v867, %v866
    %v892 = vpack.c.b16 %v869, %v868
    %v893 = vpack.c.b16 %v871, %v870
    %v894 = vpack.c.b16 %v873, %v872
    %v895 = vpack.c.b16 %v875, %v874
    %v896 = vpack.c.b16 %v877, %v876
    %v897 = vpack.c.b16 %v879, %v878
    %v898 = vpack.c.b16 %v881, %v880
    %v899 = vpack.c.b16 %v883, %v882
    %916 = vmatprep.subr.bf16.mxu0 0
    %917 = vmatpush1.bf16.msra.mxu0 %v884
    %918 = vmatprep.subr.bf16.mxu0 0
    %919 = vmatpush1.bf16.msra.mxu0 %v885
    %920 = vmatprep.subr.bf16.mxu0 0
    %921 = vmatpush1.bf16.msra.mxu0 %v886
    %922 = vmatprep.subr.bf16.mxu0 0
    %923 = vmatpush1.bf16.msra.mxu0 %v887
    %924 = vmatprep.subr.bf16.mxu0 0
    %925 = vmatpush1.bf16.msra.mxu0 %v888
    %926 = vmatprep.subr.bf16.mxu0 0
    %927 = vmatpush1.bf16.msra.mxu0 %v889
    %928 = vmatprep.subr.bf16.mxu0 0
    %929 = vmatpush1.bf16.msra.mxu0 %v890
    %930 = vmatprep.subr.bf16.mxu0 0
    %931 = vmatpush1.bf16.msra.mxu0 %v891
    %932 = vmatprep.subr.bf16.mxu0 0
    %933 = vmatpush1.bf16.msra.mxu0 %v892
    %934 = vmatprep.subr.bf16.mxu0 0
    %935 = vmatpush1.bf16.msra.mxu0 %v893
    %936 = vmatprep.subr.bf16.mxu0 0
    %937 = vmatpush1.bf16.msra.mxu0 %v894
    %938 = vmatprep.subr.bf16.mxu0 0
    %939 = vmatpush1.bf16.msra.mxu0 %v895
    %940 = vmatprep.subr.bf16.mxu0 0
    %941 = vmatpush1.bf16.msra.mxu0 %v896
    %942 = vmatprep.subr.bf16.mxu0 0
    %943 = vmatpush1.bf16.msra.mxu0 %v897
    %944 = vmatprep.subr.bf16.mxu0 0
    %945 = vmatpush1.bf16.msra.mxu0 %v898
    %946 = vmatprep.subr.bf16.mxu0 0
    %947 = vmatpush1.bf16.msra.mxu0 %v899
    %948 = vmatprep.mubr.bf16.mxu0 %v780
    %949 = vmatmul.mubr.bf16.gmra.mrb[0].mxu0 %v779
    %v950 = vpop.f32.mrb[0].mxu0
    %v951 = vadd.f32 %v818, %v950
    %v952 = vpop.f32.mrb[0].mxu0
    %v953 = vpop.f32.mrb[0].mxu0
    %v954 = vpop.f32.mrb[0].mxu0
    %955 = vdwg.mxu0
    %v956 = vmax.f32 %v951, 0.0
    %v957 = vld [vmem:[%s5] sm:$0x1]
    %v959 = vlaneseq
    %v960 = vshrl.u32 %v959, 7
    %v961 = vsub.s32 0, %v960
    %v962 = vrot.slane %v957, %v961
    %v964 = vmul.f32 %v956, %v962
    %vm965 = vcmask 523264
    %v966 = vsel %vm965, %v964, 0.0
    %967 = vadd.xlane.f32.xlu0 %v966
    %v968 = vpop.xlane.xlu0 %967
    %s969 = sld [smem:[#allocation2]]
    %v970 = vstv %s969
    %v971 = vadd.f32 %v968, %v970
    %v972 = vmax.f32 %v971, 0.0
    %v973 = vsub.f32 0.0, %v972
    %v974 = vmul.f32 %v973, 1.442695
    %v975 = vpow.pop %v974
    %v976 = vadd.f32 %v975, 1.0
    %v977 = vrcp.pop %v976
    %vm978 = vcmask 7168
    %979 = vst.msk [vmem:[%s7] sm:$0xff] %vm978, %v977
    // Predicated region
    $region34: #{tpu_custom_call.1} parent=1 // pred_check
      _
    $region35: #{tpu_custom_call.1} parent=1 // pred_check_branch
      %981 = sbr.rel (0) target = $region37
    $region36: #{tpu_custom_call.1} parent=1 // pred_region
      _
    $region37: #{tpu_custom_call.1} parent=1 // pred_fallthru
      _
    // Predicated region
    $region38: #{tpu_custom_call.1} parent=1 // pred_check
      _
    $region39: #{tpu_custom_call.1} parent=1 // pred_check_branch
      %983 = sbr.rel (0) target = $region41
    $region40: #{tpu_custom_call.1} parent=1 // pred_region
      _
    $region41: #{tpu_custom_call.1} parent=1 // pred_fallthru
      _
    %984 = vsyncpa [#allocation4], 1

</llo_original>
